<compile_context>
chip_gen: v6e
topology: v6e:2x2x1
jax: 0.10.0
libtpu: 0.0.40
codegen_flags: <defaults>
</compile_context>

<pallas_src>
import functools

import jax
import jax.numpy as jnp
import numpy as np
from jax import lax
from jax.experimental import pallas as pl
from jax.experimental.pallas import tpu as pltpu

MXU_DTYPE = jnp.bfloat16   # matmul operand dtype; accumulation is always f32
BN_EPS = 1e-5


# ---------------------------------------------------------------------------
# Kernel
# ---------------------------------------------------------------------------
def cnn1d3l_kernel(x_ref,
                   w1_ref, b1_ref,
                   w2_ref, b2_ref,
                   w3_ref, b3_ref,
                   fcw_ref, fcb_ref,
                   out_ref,
                   *, seq_len, layer1_on_vpu):
    """One batch tile.

    x_ref   : (B_TILE*L, Cin)     f32   samples stacked along sublanes
    w1_ref  : (3, Cin, 32)        f32 if Cin==1 (VPU path) else bf16
    wK_ref  : (3, CinK, CoutK)    bf16  per-tap blocks, BN scale folded in
    bK_ref  : (1, CoutK)          f32   folded conv bias + BN bias
    fcw_ref : (128, C_pad)        bf16  FC weight, 1/L folded in, lane-padded
    fcb_ref : (1, C_pad)          f32
    out_ref : (B_TILE, C_pad)     f32   lane-dense output block
    """
    rows = x_ref.shape[0]
    L = seq_len
    B = rows // L

    # Per-sample boundary masks for the k=3, padding=1 conv: row i of the slab
    # is timestep (i % L) of sample (i // L); the rolled copies must not leak
    # across sample boundaries (or wrap around the slab).
    ridx = lax.broadcasted_iota(jnp.int32, (rows, 1), 0)
    not_first = (ridx % L != 0).astype(jnp.float32)        # kills x[l-1] tap at l == 0
    not_last = (ridx % L != L - 1).astype(jnp.float32)     # kills x[l+1] tap at l == L-1

    def taps(h):
        # Shifts ride the XLU via pltpu.roll; masks are cheap VPU multiplies.
        h_prev = pltpu.roll(h, 1, axis=0) * not_first          # h[l-1]
        h_next = pltpu.roll(h, rows - 1, axis=0) * not_last    # h[l+1] (shift by -1)
        return h_prev, h_next

    def conv_bn_relu_mxu(h, w_ref, b_ref):
        # Three accumulated MXU matmuls (no lane-unaligned im2col concat, so
        # no relayout lane-shifts stealing vector-extended slots from vmatmul).
        h_prev, h_next = taps(h)
        wd = w_ref.dtype
        y = jnp.dot(h.astype(wd), w_ref[1], preferred_element_type=jnp.float32)
        y = y + jnp.dot(h_prev.astype(wd), w_ref[0], preferred_element_type=jnp.float32)
        y = y + jnp.dot(h_next.astype(wd), w_ref[2], preferred_element_type=jnp.float32)
        return jnp.maximum(y + b_ref[...], 0.0)                # folded BN bias + ReLU
        # Dropout: identity in eval mode.

    def conv_bn_relu_vpu(h, w_ref, b_ref):
        # Cin == 1: a depth-1 matmul wastes the MXU; three broadcast FMAs on
        # the (slack) VPU, fully in f32.
        h_prev, h_next = taps(h)
        y = h * w_ref[1] + h_prev * w_ref[0] + h_next * w_ref[2]
        return jnp.maximum(y + b_ref[...], 0.0)

    h = x_ref[...].astype(jnp.float32)                          # (rows, Cin)
    if layer1_on_vpu:
        h = conv_bn_relu_vpu(h, w1_ref, b1_ref)                 # (rows, 32)
    else:
        h = conv_bn_relu_mxu(h, w1_ref, b1_ref)
    h = conv_bn_relu_mxu(h, w2_ref, b2_ref)                     # (rows, 64)
    h = conv_bn_relu_mxu(h, w3_ref, b3_ref)                     # (rows, 128)

    # Global average pool over L: 1/L is folded into fcw, so a plain sum is
    # enough.  L % 8 == 0 keeps the (B, L, C) reshape a free sublane regroup.
    pooled = jnp.sum(h.reshape(B, L, h.shape[-1]), axis=1)      # (B, 128)

    logits = jnp.dot(pooled.astype(fcw_ref.dtype), fcw_ref[...],
                     preferred_element_type=jnp.float32) + fcb_ref[...]
    out_ref[...] = logits                                       # (B, C_pad) dense store


# ---------------------------------------------------------------------------
# Wrapper
# ---------------------------------------------------------------------------
def _choose_batch_tile(n, l):
    """Samples per grid step.

    Targets ~2048 slab rows per step (amortises per-step overhead and MXU
    weight re-pushes), caps at 8192 rows so the per-row VMEM cost (~3 KB live
    f32/bf16 activations + 1 KB lane-padded, double-buffered input) stays well
    under the 48 MiB limit set below, and keeps >= 2 grid steps whenever there
    is enough work so ("parallel",) shards across v7x's two TensorCores.
    Multi-step tiles are kept a multiple of 8 samples so the (b_tile, 128)
    output block stays sublane-aligned.
    """
    target_rows, max_rows = 2048, 8192
    bt = max(1, min(target_rows, max_rows) // l)
    if n * l >= 512:                       # enough work: aim for >= 2 steps (v7x)
        bt = min(bt, pl.cdiv(n, 2))
    bt = max(8, (bt // 8) * 8)             # sublane alignment for multi-step grids
    return n if bt >= n else bt


def _prepare_params(raw, seq_len, eps=BN_EPS):
    """Fold eval-mode BN into conv weights/bias; fold 1/L into the FC weight."""
    ops = []
    for idx, lyr in enumerate(raw["layers"]):
        scale = lyr["gamma"] / jnp.sqrt(lyr["var"] + eps)              # (Cout,)
        bias = (lyr["b"] - lyr["mean"]) * scale + lyr["beta"]          # (Cout,)
        w = lyr["w"] * scale[None, None, :]                            # (3, Cin, Cout)
        cin = w.shape[1]
        # Layer 1 with Cin==1 stays f32 and runs on the VPU in-kernel.
        w_dtype = jnp.float32 if (idx == 0 and cin == 1) else MXU_DTYPE
        ops += [w.astype(w_dtype),
                bias.reshape(1, -1).astype(jnp.float32)]
    num_classes = raw["fcw"].shape[1]
    c_pad = 128 * pl.cdiv(num_classes, 128)                            # lane-dense output
    fcw = jnp.pad(raw["fcw"] / seq_len,                                # fold 1/L (pool)
                  ((0, 0), (0, c_pad - num_classes))).astype(MXU_DTYPE)
    fcb = jnp.pad(raw["fcb"], ((0, c_pad - num_classes),)).reshape(1, c_pad)
    ops += [fcw, fcb.astype(jnp.float32)]
    return ops, num_classes, c_pad


@jax.jit
def cnn1d3l_forward(x_ncl, raw):
    """x_ncl: (N, Cin, L) f32 (PyTorch NCL layout). Returns (N, num_classes)."""
    x_nlc = jnp.transpose(x_ncl, (0, 2, 1)).astype(jnp.float32)        # (N, L, Cin)
    n, l, cin = x_nlc.shape
    ops, num_classes, c_pad = _prepare_params(raw, l)

    b_tile = _choose_batch_tile(n, l)
    n_pad = b_tile * pl.cdiv(n, b_tile)
    if n_pad != n:
        x_nlc = jnp.pad(x_nlc, ((0, n_pad - n), (0, 0), (0, 0)))
    x2d = x_nlc.reshape(n_pad * l, cin)          # samples stacked along sublanes
    rows = b_tile * l

    def full_spec(a):
        return pl.BlockSpec(a.shape, lambda b, nd=a.ndim: (0,) * nd)

    grid_spec = pltpu.PrefetchScalarGridSpec(
        num_scalar_prefetch=0,
        grid=(n_pad // b_tile,),
        in_specs=[pl.BlockSpec((rows, cin), lambda b: (b, 0))]
                 + [full_spec(a) for a in ops],
        out_specs=pl.BlockSpec((b_tile, c_pad), lambda b: (b, 0)),
    )

    out = pl.pallas_call(
        functools.partial(cnn1d3l_kernel, seq_len=l, layer1_on_vpu=(cin == 1)),
        out_shape=jax.ShapeDtypeStruct((n_pad, c_pad), jnp.float32),
        grid_spec=grid_spec,
        compiler_params=pltpu.CompilerParams(
            dimension_semantics=("parallel",),
            vmem_limit_bytes=48 * 1024 * 1024),   # > v5e 16MiB / v6e-v7x 32MiB defaults, < v7x 64MiB physical
    )(x2d, *ops)
    return out[:n, :num_classes]


# ---------------------------------------------------------------------------
# Parameters & pure-JAX reference
# ---------------------------------------------------------------------------
def init_raw_params(key, input_channels=1, num_classes=2):
    """Synthetic parameters matching the PyTorch module's shapes.

    Conv weights are stored tap-major as (3, Cin, Cout), i.e. the PyTorch
    (Cout, Cin, 3) weight transposed (2, 1, 0); the FC weight is stored as
    (128, num_classes) == PyTorch fc.weight.T.
    """
    def conv_layer(k, cin, cout):
        kw, kb, kg, kbt, km, kv = jax.random.split(k, 6)
        return dict(
            w=0.1 * jax.random.normal(kw, (3, cin, cout), jnp.float32),
            b=0.1 * jax.random.normal(kb, (cout,), jnp.float32),
            gamma=1.0 + 0.1 * jax.random.normal(kg, (cout,), jnp.float32),
            beta=0.1 * jax.random.normal(kbt, (cout,), jnp.float32),
            mean=0.05 * jax.random.normal(km, (cout,), jnp.float32),
            var=jnp.abs(1.0 + 0.1 * jax.random.normal(kv, (cout,), jnp.float32)),
        )

    k1, k2, k3, kfw, kfb = jax.random.split(key, 5)
    return dict(
        layers=[conv_layer(k1, input_channels, 32),
                conv_layer(k2, 32, 64),
                conv_layer(k3, 64, 128)],
        fcw=0.1 * jax.random.normal(kfw, (128, num_classes), jnp.float32),
        fcb=0.1 * jax.random.normal(kfb, (num_classes,), jnp.float32),
    )


def reference_forward(x_ncl, raw, eps=BN_EPS):
    """Pure-JAX full-f32 reference (unfused conv + eval BN + ReLU + pool + FC)."""
    hi = lax.Precision.HIGHEST
    x = jnp.transpose(x_ncl, (0, 2, 1)).astype(jnp.float32)            # (N, L, Cin)
    for lyr in raw["layers"]:
        _, L, _ = x.shape
        xp = jnp.pad(x, ((0, 0), (1, 1), (0, 0)))
        y = sum(jnp.einsum("nlc,cd->nld", xp[:, k:k + L], lyr["w"][k], precision=hi)
                for k in range(3))
        y = y + lyr["b"]
        y = (y - lyr["mean"]) / jnp.sqrt(lyr["var"] + eps) * lyr["gamma"] + lyr["beta"]
        x = jnp.maximum(y, 0.0)
    pooled = jnp.mean(x, axis=1)                                       # (N, 128)
    return jnp.dot(pooled, raw["fcw"], precision=hi) + raw["fcb"]


if __name__ == "__main__":
    key = jax.random.PRNGKey(0)
    k_x, k_p = jax.random.split(key)

    N, Cin, L = 2, 1, 16                      # PyTorch NCL input; L % 8 == 0
    x = jax.random.normal(k_x, (N, Cin, L), jnp.float32)
    raw = init_raw_params(k_p, input_channels=Cin, num_classes=2)

    out = jax.block_until_ready(cnn1d3l_forward(x, raw))
    ref = jax.block_until_ready(reference_forward(x, raw))

    # Layers 2/3 and the FC use bf16 MXU operands with f32 accumulation; the
    # reference is full f32, so allow for that rounding.
    np.testing.assert_allclose(np.asarray(out), np.asarray(ref), rtol=2e-2, atol=2e-2)
    print("KERNEL_OK")
</pallas_src>

<mosaic_0001>
module attributes {stable_mosaic.version = 11 : i64} {
  func.func @cnn1d3l_kernel(%arg0: i32, %arg1: memref<32x1xf32, #tpu.memory_space<vmem>>, %arg2: memref<3x1x32xf32, #tpu.memory_space<vmem>>, %arg3: memref<1x32xf32, #tpu.memory_space<vmem>>, %arg4: memref<3x32x64xbf16, #tpu.memory_space<vmem>>, %arg5: memref<1x64xf32, #tpu.memory_space<vmem>>, %arg6: memref<3x64x128xbf16, #tpu.memory_space<vmem>>, %arg7: memref<1x128xf32, #tpu.memory_space<vmem>>, %arg8: memref<128x128xbf16, #tpu.memory_space<vmem>>, %arg9: memref<1x128xf32, #tpu.memory_space<vmem>>, %arg10: memref<2x128xf32, #tpu.memory_space<vmem>>) attributes {dimension_semantics = [#tpu.dimension_semantics<parallel>], iteration_bounds = array<i64: 1>, scalar_prefetch = 0 : i64, scratch_operands = 0 : i64, tpu.core_type = #tpu.core_type<tc>, window_params = [{transform_indices = @transform_0, window_bounds = array<i64: 32, 1>}, {pipeline_mode = #tpu.pipeline_mode<synchronous>, transform_indices = @transform_1, window_bounds = array<i64: 3, 1, 32>}, {pipeline_mode = #tpu.pipeline_mode<synchronous>, transform_indices = @transform_2, window_bounds = array<i64: 1, 32>}, {pipeline_mode = #tpu.pipeline_mode<synchronous>, transform_indices = @transform_3, window_bounds = array<i64: 3, 32, 64>}, {pipeline_mode = #tpu.pipeline_mode<synchronous>, transform_indices = @transform_4, window_bounds = array<i64: 1, 64>}, {pipeline_mode = #tpu.pipeline_mode<synchronous>, transform_indices = @transform_5, window_bounds = array<i64: 3, 64, 128>}, {pipeline_mode = #tpu.pipeline_mode<synchronous>, transform_indices = @transform_6, window_bounds = array<i64: 1, 128>}, {pipeline_mode = #tpu.pipeline_mode<synchronous>, transform_indices = @transform_7, window_bounds = array<i64: 128, 128>}, {pipeline_mode = #tpu.pipeline_mode<synchronous>, transform_indices = @transform_8, window_bounds = array<i64: 1, 128>}, {transform_indices = @transform_9, window_bounds = array<i64: 2, 128>}]} {
    %0 = tpu.iota {dimensions = array<i32: 0>} : vector<32x1xi32>
    %c16_i32 = arith.constant 16 : i32
    %c0_i32 = arith.constant 0 : i32
    %1 = arith.cmpi eq, %c16_i32, %c0_i32 : i32
    %c1_i32 = arith.constant 1 : i32
    %2 = arith.select %1, %c1_i32, %c16_i32 : i32
    %3 = vector.broadcast %2 : i32 to vector<32x1xi32>
    %4 = arith.remsi %0, %3 : vector<32x1xi32>
    %c0_i32_0 = arith.constant 0 : i32
    %5 = vector.broadcast %c0_i32_0 : i32 to vector<32x1xi32>
    %6 = arith.cmpi ne, %4, %5 : vector<32x1xi32>
    %c0_i32_1 = arith.constant 0 : i32
    %7 = vector.broadcast %c0_i32_1 : i32 to vector<32x1xi32>
    %8 = arith.cmpi slt, %4, %7 : vector<32x1xi32>
    %c0_i32_2 = arith.constant 0 : i32
    %9 = arith.cmpi slt, %2, %c0_i32_2 : i32
    %10 = vector.broadcast %9 : i1 to vector<32x1xi1>
    %11 = vector.broadcast %10 : vector<32x1xi1> to vector<32x1xi1>
    %12 = arith.xori %8, %11 : vector<32x1xi1>
    %13 = arith.andi %12, %6 : vector<32x1xi1>
    %14 = vector.broadcast %2 : i32 to vector<32x1xi32>
    %15 = arith.addi %4, %14 : vector<32x1xi32>
    %16 = arith.select %13, %15, %4 : vector<32x1xi1>, vector<32x1xi32>
    %c0_i32_3 = arith.constant 0 : i32
    %17 = vector.broadcast %c0_i32_3 : i32 to vector<32x1xi32>
    %18 = arith.cmpi ne, %16, %17 : vector<32x1xi32>
    %19 = arith.extui %18 : vector<32x1xi1> to vector<32x1xi32>
    %20 = arith.sitofp %19 : vector<32x1xi32> to vector<32x1xf32>
    %c16_i32_4 = arith.constant 16 : i32
    %c0_i32_5 = arith.constant 0 : i32
    %21 = arith.cmpi eq, %c16_i32_4, %c0_i32_5 : i32
    %c1_i32_6 = arith.constant 1 : i32
    %22 = arith.select %21, %c1_i32_6, %c16_i32_4 : i32
    %23 = vector.broadcast %22 : i32 to vector<32x1xi32>
    %24 = arith.remsi %0, %23 : vector<32x1xi32>
    %c0_i32_7 = arith.constant 0 : i32
    %25 = vector.broadcast %c0_i32_7 : i32 to vector<32x1xi32>
    %26 = arith.cmpi ne, %24, %25 : vector<32x1xi32>
    %c0_i32_8 = arith.constant 0 : i32
    %27 = vector.broadcast %c0_i32_8 : i32 to vector<32x1xi32>
    %28 = arith.cmpi slt, %24, %27 : vector<32x1xi32>
    %c0_i32_9 = arith.constant 0 : i32
    %29 = arith.cmpi slt, %22, %c0_i32_9 : i32
    %30 = vector.broadcast %29 : i1 to vector<32x1xi1>
    %31 = vector.broadcast %30 : vector<32x1xi1> to vector<32x1xi1>
    %32 = arith.xori %28, %31 : vector<32x1xi1>
    %33 = arith.andi %32, %26 : vector<32x1xi1>
    %34 = vector.broadcast %22 : i32 to vector<32x1xi32>
    %35 = arith.addi %24, %34 : vector<32x1xi32>
    %36 = arith.select %33, %35, %24 : vector<32x1xi1>, vector<32x1xi32>
    %c15_i32 = arith.constant 15 : i32
    %37 = vector.broadcast %c15_i32 : i32 to vector<32x1xi32>
    %38 = arith.cmpi ne, %36, %37 : vector<32x1xi32>
    %39 = arith.extui %38 : vector<32x1xi1> to vector<32x1xi32>
    %40 = arith.sitofp %39 : vector<32x1xi32> to vector<32x1xf32>
    %c0 = arith.constant 0 : index
    %c0_10 = arith.constant 0 : index
    %41 = vector.load %arg1[%c0, %c0_10] : memref<32x1xf32, #tpu.memory_space<vmem>>, vector<32x1xf32>
    %c1_i32_11 = arith.constant 1 : i32
    %42 = tpu.dynamic_rotate %41 by %c1_i32_11 dim 0 : vector<32x1xf32>, i32 -> vector<32x1xf32>
    %43 = arith.mulf %42, %20 : vector<32x1xf32>
    %c31_i32 = arith.constant 31 : i32
    %44 = tpu.dynamic_rotate %41 by %c31_i32 dim 0 : vector<32x1xf32>, i32 -> vector<32x1xf32>
    %45 = arith.mulf %44, %40 : vector<32x1xf32>
    %c1 = arith.constant 1 : index
    %c0_12 = arith.constant 0 : index
    %c0_13 = arith.constant 0 : index
    %46 = vector.load %arg2[%c1, %c0_12, %c0_13] : memref<3x1x32xf32, #tpu.memory_space<vmem>>, vector<1x1x32xf32>
    %47 = vector.shape_cast %46 : vector<1x1x32xf32> to vector<1x32xf32>
    %48 = vector.broadcast %41 : vector<32x1xf32> to vector<32x32xf32>
    %49 = vector.broadcast %47 : vector<1x32xf32> to vector<32x32xf32>
    %50 = arith.mulf %48, %49 : vector<32x32xf32>
    %c0_14 = arith.constant 0 : index
    %c0_15 = arith.constant 0 : index
    %c0_16 = arith.constant 0 : index
    %51 = vector.load %arg2[%c0_14, %c0_15, %c0_16] : memref<3x1x32xf32, #tpu.memory_space<vmem>>, vector<1x1x32xf32>
    %52 = vector.shape_cast %51 : vector<1x1x32xf32> to vector<1x32xf32>
    %53 = vector.broadcast %43 : vector<32x1xf32> to vector<32x32xf32>
    %54 = vector.broadcast %52 : vector<1x32xf32> to vector<32x32xf32>
    %55 = arith.mulf %53, %54 : vector<32x32xf32>
    %56 = arith.addf %50, %55 : vector<32x32xf32>
    %c2 = arith.constant 2 : index
    %c0_17 = arith.constant 0 : index
    %c0_18 = arith.constant 0 : index
    %57 = vector.load %arg2[%c2, %c0_17, %c0_18] : memref<3x1x32xf32, #tpu.memory_space<vmem>>, vector<1x1x32xf32>
    %58 = vector.shape_cast %57 : vector<1x1x32xf32> to vector<1x32xf32>
    %59 = vector.broadcast %45 : vector<32x1xf32> to vector<32x32xf32>
    %60 = vector.broadcast %58 : vector<1x32xf32> to vector<32x32xf32>
    %61 = arith.mulf %59, %60 : vector<32x32xf32>
    %62 = arith.addf %56, %61 : vector<32x32xf32>
    %c0_19 = arith.constant 0 : index
    %c0_20 = arith.constant 0 : index
    %63 = vector.load %arg3[%c0_19, %c0_20] : memref<1x32xf32, #tpu.memory_space<vmem>>, vector<1x32xf32>
    %64 = vector.broadcast %63 : vector<1x32xf32> to vector<32x32xf32>
    %65 = arith.addf %62, %64 : vector<32x32xf32>
    %cst = arith.constant 0.000000e+00 : f32
    %66 = vector.broadcast %cst : f32 to vector<32x32xf32>
    %67 = arith.maximumf %65, %66 : vector<32x32xf32>
    %c1_i32_21 = arith.constant 1 : i32
    %68 = tpu.dynamic_rotate %67 by %c1_i32_21 dim 0 : vector<32x32xf32>, i32 -> vector<32x32xf32>
    %69 = vector.broadcast %20 : vector<32x1xf32> to vector<32x32xf32>
    %70 = arith.mulf %68, %69 : vector<32x32xf32>
    %c31_i32_22 = arith.constant 31 : i32
    %71 = tpu.dynamic_rotate %67 by %c31_i32_22 dim 0 : vector<32x32xf32>, i32 -> vector<32x32xf32>
    %72 = vector.broadcast %40 : vector<32x1xf32> to vector<32x32xf32>
    %73 = arith.mulf %71, %72 : vector<32x32xf32>
    %74 = arith.truncf %67 : vector<32x32xf32> to vector<32x32xbf16>
    %c1_23 = arith.constant 1 : index
    %c0_24 = arith.constant 0 : index
    %c0_25 = arith.constant 0 : index
    %75 = vector.load %arg4[%c1_23, %c0_24, %c0_25] : memref<3x32x64xbf16, #tpu.memory_space<vmem>>, vector<1x32x64xbf16>
    %76 = vector.shape_cast %75 : vector<1x32x64xbf16> to vector<32x64xbf16>
    %cst_26 = arith.constant dense<0.000000e+00> : vector<32x64xf32>
    %77 = tpu.matmul %74, %76, %cst_26 {dimension_numbers = #tpu.dot_dimension_numbers<[1], [0], [0], [1], [0, 0, 1, 1], [], []>} : vector<32x32xbf16>, vector<32x64xbf16>, vector<32x64xf32> -> vector<32x64xf32>
    %78 = arith.truncf %70 : vector<32x32xf32> to vector<32x32xbf16>
    %c0_27 = arith.constant 0 : index
    %c0_28 = arith.constant 0 : index
    %c0_29 = arith.constant 0 : index
    %79 = vector.load %arg4[%c0_27, %c0_28, %c0_29] : memref<3x32x64xbf16, #tpu.memory_space<vmem>>, vector<1x32x64xbf16>
    %80 = vector.shape_cast %79 : vector<1x32x64xbf16> to vector<32x64xbf16>
    %cst_30 = arith.constant dense<0.000000e+00> : vector<32x64xf32>
    %81 = tpu.matmul %78, %80, %cst_30 {dimension_numbers = #tpu.dot_dimension_numbers<[1], [0], [0], [1], [0, 0, 1, 1], [], []>} : vector<32x32xbf16>, vector<32x64xbf16>, vector<32x64xf32> -> vector<32x64xf32>
    %82 = arith.addf %77, %81 : vector<32x64xf32>
    %83 = arith.truncf %73 : vector<32x32xf32> to vector<32x32xbf16>
    %c2_31 = arith.constant 2 : index
    %c0_32 = arith.constant 0 : index
    %c0_33 = arith.constant 0 : index
    %84 = vector.load %arg4[%c2_31, %c0_32, %c0_33] : memref<3x32x64xbf16, #tpu.memory_space<vmem>>, vector<1x32x64xbf16>
    %85 = vector.shape_cast %84 : vector<1x32x64xbf16> to vector<32x64xbf16>
    %cst_34 = arith.constant dense<0.000000e+00> : vector<32x64xf32>
    %86 = tpu.matmul %83, %85, %cst_34 {dimension_numbers = #tpu.dot_dimension_numbers<[1], [0], [0], [1], [0, 0, 1, 1], [], []>} : vector<32x32xbf16>, vector<32x64xbf16>, vector<32x64xf32> -> vector<32x64xf32>
    %87 = arith.addf %82, %86 : vector<32x64xf32>
    %c0_35 = arith.constant 0 : index
    %c0_36 = arith.constant 0 : index
    %88 = vector.load %arg5[%c0_35, %c0_36] : memref<1x64xf32, #tpu.memory_space<vmem>>, vector<1x64xf32>
    %89 = vector.broadcast %88 : vector<1x64xf32> to vector<32x64xf32>
    %90 = arith.addf %87, %89 : vector<32x64xf32>
    %cst_37 = arith.constant 0.000000e+00 : f32
    %91 = vector.broadcast %cst_37 : f32 to vector<32x64xf32>
    %92 = arith.maximumf %90, %91 : vector<32x64xf32>
    %c1_i32_38 = arith.constant 1 : i32
    %93 = tpu.dynamic_rotate %92 by %c1_i32_38 dim 0 : vector<32x64xf32>, i32 -> vector<32x64xf32>
    %94 = vector.broadcast %20 : vector<32x1xf32> to vector<32x64xf32>
    %95 = arith.mulf %93, %94 : vector<32x64xf32>
    %c31_i32_39 = arith.constant 31 : i32
    %96 = tpu.dynamic_rotate %92 by %c31_i32_39 dim 0 : vector<32x64xf32>, i32 -> vector<32x64xf32>
    %97 = vector.broadcast %40 : vector<32x1xf32> to vector<32x64xf32>
    %98 = arith.mulf %96, %97 : vector<32x64xf32>
    %99 = arith.truncf %92 : vector<32x64xf32> to vector<32x64xbf16>
    %c1_40 = arith.constant 1 : index
    %c0_41 = arith.constant 0 : index
    %c0_42 = arith.constant 0 : index
    %100 = vector.load %arg6[%c1_40, %c0_41, %c0_42] : memref<3x64x128xbf16, #tpu.memory_space<vmem>>, vector<1x64x128xbf16>
    %101 = vector.shape_cast %100 : vector<1x64x128xbf16> to vector<64x128xbf16>
    %cst_43 = arith.constant dense<0.000000e+00> : vector<32x128xf32>
    %102 = tpu.matmul %99, %101, %cst_43 {dimension_numbers = #tpu.dot_dimension_numbers<[1], [0], [0], [1], [0, 0, 1, 1], [], []>} : vector<32x64xbf16>, vector<64x128xbf16>, vector<32x128xf32> -> vector<32x128xf32>
    %103 = arith.truncf %95 : vector<32x64xf32> to vector<32x64xbf16>
    %c0_44 = arith.constant 0 : index
    %c0_45 = arith.constant 0 : index
    %c0_46 = arith.constant 0 : index
    %104 = vector.load %arg6[%c0_44, %c0_45, %c0_46] : memref<3x64x128xbf16, #tpu.memory_space<vmem>>, vector<1x64x128xbf16>
    %105 = vector.shape_cast %104 : vector<1x64x128xbf16> to vector<64x128xbf16>
    %cst_47 = arith.constant dense<0.000000e+00> : vector<32x128xf32>
    %106 = tpu.matmul %103, %105, %cst_47 {dimension_numbers = #tpu.dot_dimension_numbers<[1], [0], [0], [1], [0, 0, 1, 1], [], []>} : vector<32x64xbf16>, vector<64x128xbf16>, vector<32x128xf32> -> vector<32x128xf32>
    %107 = arith.addf %102, %106 : vector<32x128xf32>
    %108 = arith.truncf %98 : vector<32x64xf32> to vector<32x64xbf16>
    %c2_48 = arith.constant 2 : index
    %c0_49 = arith.constant 0 : index
    %c0_50 = arith.constant 0 : index
    %109 = vector.load %arg6[%c2_48, %c0_49, %c0_50] : memref<3x64x128xbf16, #tpu.memory_space<vmem>>, vector<1x64x128xbf16>
    %110 = vector.shape_cast %109 : vector<1x64x128xbf16> to vector<64x128xbf16>
    %cst_51 = arith.constant dense<0.000000e+00> : vector<32x128xf32>
    %111 = tpu.matmul %108, %110, %cst_51 {dimension_numbers = #tpu.dot_dimension_numbers<[1], [0], [0], [1], [0, 0, 1, 1], [], []>} : vector<32x64xbf16>, vector<64x128xbf16>, vector<32x128xf32> -> vector<32x128xf32>
    %112 = arith.addf %107, %111 : vector<32x128xf32>
    %c0_52 = arith.constant 0 : index
    %c0_53 = arith.constant 0 : index
    %113 = vector.load %arg7[%c0_52, %c0_53] : memref<1x128xf32, #tpu.memory_space<vmem>>, vector<1x128xf32>
    %114 = vector.broadcast %113 : vector<1x128xf32> to vector<32x128xf32>
    %115 = arith.addf %112, %114 : vector<32x128xf32>
    %cst_54 = arith.constant 0.000000e+00 : f32
    %116 = vector.broadcast %cst_54 : f32 to vector<32x128xf32>
    %117 = arith.maximumf %115, %116 : vector<32x128xf32>
    %118 = vector.shape_cast %117 : vector<32x128xf32> to vector<2x16x128xf32>
    %cst_55 = arith.constant dense<0.000000e+00> : vector<2x128xf32>
    %119 = vector.multi_reduction <add>, %118, %cst_55 [1] : vector<2x16x128xf32> to vector<2x128xf32>
    %120 = arith.truncf %119 : vector<2x128xf32> to vector<2x128xbf16>
    %c0_56 = arith.constant 0 : index
    %c0_57 = arith.constant 0 : index
    %121 = vector.load %arg8[%c0_56, %c0_57] : memref<128x128xbf16, #tpu.memory_space<vmem>>, vector<128x128xbf16>
    %cst_58 = arith.constant dense<0.000000e+00> : vector<2x128xf32>
    %122 = tpu.matmul %120, %121, %cst_58 {dimension_numbers = #tpu.dot_dimension_numbers<[1], [0], [0], [1], [0, 0, 1, 1], [], []>} : vector<2x128xbf16>, vector<128x128xbf16>, vector<2x128xf32> -> vector<2x128xf32>
    %c0_59 = arith.constant 0 : index
    %c0_60 = arith.constant 0 : index
    %123 = vector.load %arg9[%c0_59, %c0_60] : memref<1x128xf32, #tpu.memory_space<vmem>>, vector<1x128xf32>
    %124 = vector.broadcast %123 : vector<1x128xf32> to vector<2x128xf32>
    %125 = arith.addf %122, %124 : vector<2x128xf32>
    %c0_61 = arith.constant 0 : index
    %c0_62 = arith.constant 0 : index
    %126 = vector.load %arg10[%c0_61, %c0_62] : memref<2x128xf32, #tpu.memory_space<vmem>>, vector<2x128xf32>
    tpu.vector_store %arg10[%c0_61, %c0_62], %125 {strides = array<i32>} : memref<2x128xf32, #tpu.memory_space<vmem>>, vector<2x128xf32>,
    return
  }
  func.func @transform_0(%arg0: i32) -> (i32, i32) {
    %c0_i32 = arith.constant 0 : i32
    %c0_i32_0 = arith.constant 0 : i32
    return %arg0, %c0_i32 : i32, i32
  }
  func.func @transform_1(%arg0: i32) -> (i32, i32, i32) {
    %c0_i32 = arith.constant 0 : i32
    %c0_i32_0 = arith.constant 0 : i32
    %c0_i32_1 = arith.constant 0 : i32
    %c0_i32_2 = arith.constant 0 : i32
    return %c0_i32, %c0_i32_0, %c0_i32_1 : i32, i32, i32
  }
  func.func @transform_2(%arg0: i32) -> (i32, i32) {
    %c0_i32 = arith.constant 0 : i32
    %c0_i32_0 = arith.constant 0 : i32
    %c0_i32_1 = arith.constant 0 : i32
    return %c0_i32, %c0_i32_0 : i32, i32
  }
  func.func @transform_3(%arg0: i32) -> (i32, i32, i32) {
    %c0_i32 = arith.constant 0 : i32
    %c0_i32_0 = arith.constant 0 : i32
    %c0_i32_1 = arith.constant 0 : i32
    %c0_i32_2 = arith.constant 0 : i32
    return %c0_i32, %c0_i32_0, %c0_i32_1 : i32, i32, i32
  }
  func.func @transform_4(%arg0: i32) -> (i32, i32) {
    %c0_i32 = arith.constant 0 : i32
    %c0_i32_0 = arith.constant 0 : i32
    %c0_i32_1 = arith.constant 0 : i32
    return %c0_i32, %c0_i32_0 : i32, i32
  }
  func.func @transform_5(%arg0: i32) -> (i32, i32, i32) {
    %c0_i32 = arith.constant 0 : i32
    %c0_i32_0 = arith.constant 0 : i32
    %c0_i32_1 = arith.constant 0 : i32
    %c0_i32_2 = arith.constant 0 : i32
    return %c0_i32, %c0_i32_0, %c0_i32_1 : i32, i32, i32
  }
  func.func @transform_6(%arg0: i32) -> (i32, i32) {
    %c0_i32 = arith.constant 0 : i32
    %c0_i32_0 = arith.constant 0 : i32
    %c0_i32_1 = arith.constant 0 : i32
    return %c0_i32, %c0_i32_0 : i32, i32
  }
  func.func @transform_7(%arg0: i32) -> (i32, i32) {
    %c0_i32 = arith.constant 0 : i32
    %c0_i32_0 = arith.constant 0 : i32
    %c0_i32_1 = arith.constant 0 : i32
    return %c0_i32, %c0_i32_0 : i32, i32
  }
  func.func @transform_8(%arg0: i32) -> (i32, i32) {
    %c0_i32 = arith.constant 0 : i32
    %c0_i32_0 = arith.constant 0 : i32
    %c0_i32_1 = arith.constant 0 : i32
    return %c0_i32, %c0_i32_0 : i32, i32
  }
  func.func @transform_9(%arg0: i32) -> (i32, i32) {
    %c0_i32 = arith.constant 0 : i32
    %c0_i32_0 = arith.constant 0 : i32
    return %arg0, %c0_i32 : i32, i32
  }
}

</mosaic_0001>

<llo_original>
// kernel: cnn1d3l_forward.1
$region0: #{cnn1d3l_forward.1}
  #allocation0 [shape = 'u32[]', space=smem, size = 0x4, offset = 0x4, fixed_abs, tag = 'smem constant byte address 0x4 - core index']
  #allocation1 [shape = 'u32[144,128]{1,0:T(1,128)}', space=vmem, size = 0x12000, scoped, tag = 'internal scratch']
  %s0 = inlined_call_operand.vmem [shape: f32[32,1], index: 0, kind: input, shape index: {}]
  %s1 = inlined_call_operand.vmem [shape: f32[3,1,32], index: 1, kind: input, shape index: {}]
  %s2 = inlined_call_operand.vmem [shape: f32[1,32], index: 2, kind: input, shape index: {}]
  %s3 = inlined_call_operand.vmem [shape: bf16[3,32,64], index: 3, kind: input, shape index: {}]
  %s4 = inlined_call_operand.vmem [shape: f32[1,64], index: 4, kind: input, shape index: {}]
  %s5 = inlined_call_operand.vmem [shape: bf16[3,64,128], index: 5, kind: input, shape index: {}]
  %s6 = inlined_call_operand.vmem [shape: f32[1,128], index: 6, kind: input, shape index: {}]
  %s7 = inlined_call_operand.vmem [shape: bf16[128,128], index: 7, kind: input, shape index: {}]
  %s8 = inlined_call_operand.vmem [shape: f32[1,128], index: 8, kind: input, shape index: {}]
  %s9 = inlined_call_operand.hbm [shape: f32[2,128], index: 9, kind: output, shape index: {}]
  %s10 = sld [smem:[#allocation0]]
  $region46: #{cnn1d3l_forward.1} parent=0
    _
  %s12 = ssub.s32 1, %s10
  %s13 = scalar_select 0, %s12, %s10
  $region1: #{cnn1d3l_forward.1} parent=0
    #allocation2 [shape = 'u8[1024]{0}', space=vmem, size = 0x400, scoped, tag = 'output window, operand 0, single buffered']
    #allocation3 [shape = 's32[1]{0}', space=sflag, size = 0x4, scoped, tag = 'scoped memory for cnn1d3l_forward.1']
    %14 = vsyncpa [#allocation3], 0
    // Predicated region
    $region2: #{cnn1d3l_forward.1} parent=1 // pred_check
      _
    $region3: #{cnn1d3l_forward.1} parent=1 // pred_check_branch
      %16 = sbr.rel (0) target = $region5
    $region4: #{cnn1d3l_forward.1} parent=1 // pred_region
      _
    $region5: #{cnn1d3l_forward.1} parent=1 // pred_fallthru
      _
    // Predicated region
    $region6: #{cnn1d3l_forward.1} parent=1 // pred_check
      _
    $region7: #{cnn1d3l_forward.1} parent=1 // pred_check_branch
      %18 = sbr.rel (0) target = $region9
    $region8: #{cnn1d3l_forward.1} parent=1 // pred_region
      _
    $region9: #{cnn1d3l_forward.1} parent=1 // pred_fallthru
      _
    // Predicated region
    $region10: #{cnn1d3l_forward.1} parent=1 // pred_check
      _
    $region11: #{cnn1d3l_forward.1} parent=1 // pred_check_branch
      %20 = sbr.rel (0) target = $region13
    $region12: #{cnn1d3l_forward.1} parent=1 // pred_region
      _
    $region13: #{cnn1d3l_forward.1} parent=1 // pred_fallthru
      _
    // Predicated region
    $region14: #{cnn1d3l_forward.1} parent=1 // pred_check
      _
    $region15: #{cnn1d3l_forward.1} parent=1 // pred_check_branch
      %22 = sbr.rel (0) target = $region17
    $region16: #{cnn1d3l_forward.1} parent=1 // pred_region
      _
    $region17: #{cnn1d3l_forward.1} parent=1 // pred_fallthru
      _
    // Predicated region
    $region18: #{cnn1d3l_forward.1} parent=1 // pred_check
      _
    $region19: #{cnn1d3l_forward.1} parent=1 // pred_check_branch
      %24 = sbr.rel (0) target = $region21
    $region20: #{cnn1d3l_forward.1} parent=1 // pred_region
      _
    $region21: #{cnn1d3l_forward.1} parent=1 // pred_fallthru
      _
    // Predicated region
    $region22: #{cnn1d3l_forward.1} parent=1 // pred_check
      _
    $region23: #{cnn1d3l_forward.1} parent=1 // pred_check_branch
      %26 = sbr.rel (0) target = $region25
    $region24: #{cnn1d3l_forward.1} parent=1 // pred_region
      _
    $region25: #{cnn1d3l_forward.1} parent=1 // pred_fallthru
      _
    // Predicated region
    $region26: #{cnn1d3l_forward.1} parent=1 // pred_check
      _
    $region27: #{cnn1d3l_forward.1} parent=1 // pred_check_branch
      %28 = sbr.rel (0) target = $region29
    $region28: #{cnn1d3l_forward.1} parent=1 // pred_region
      _
    $region29: #{cnn1d3l_forward.1} parent=1 // pred_fallthru
      _
    // Predicated region
    $region30: #{cnn1d3l_forward.1} parent=1 // pred_check
      _
    $region31: #{cnn1d3l_forward.1} parent=1 // pred_check_branch
      %30 = sbr.rel (0) target = $region33
    $region32: #{cnn1d3l_forward.1} parent=1 // pred_region
      _
    $region33: #{cnn1d3l_forward.1} parent=1 // pred_fallthru
      _
    // Predicated region
    $region34: #{cnn1d3l_forward.1} parent=1 // pred_check
      _
    $region35: #{cnn1d3l_forward.1} parent=1 // pred_check_branch
      %32 = sbr.rel (0) target = $region37
    $region36: #{cnn1d3l_forward.1} parent=1 // pred_region
      _
    $region37: #{cnn1d3l_forward.1} parent=1 // pred_fallthru
      _
    %v34 = vlaneseq
    %v35 = vshrl.u32 %v34, 7
    %v36 = vadd.s32 %v35, 8
    %v37 = vadd.s32 %v35, 16
    %v38 = vadd.s32 %v35, 24
    %vm39 = vcmp.lt.s32.totalorder %v35, 0
    %v40 = vsub.s32 0, %v35
    %v41 = vsel %vm39, %v40, %v35
    %v42 = vshrl.u32 %v41, 4
    %v43 = vand.u32 %v41, 15
    %v44 = vsub.s32 0, %v43
    %v45 = vsel %vm39, %v44, %v43
    %vm46 = vcmp.lt.s32.totalorder %v36, 0
    %v47 = vsub.s32 0, %v36
    %v48 = vsel %vm46, %v47, %v36
    %v49 = vshrl.u32 %v48, 4
    %v50 = vand.u32 %v48, 15
    %v51 = vsub.s32 0, %v50
    %v52 = vsel %vm46, %v51, %v50
    %vm53 = vcmp.lt.s32.totalorder %v37, 0
    %v54 = vsub.s32 0, %v37
    %v55 = vsel %vm53, %v54, %v37
    %v56 = vshrl.u32 %v55, 4
    %v57 = vand.u32 %v55, 15
    %v58 = vsub.s32 0, %v57
    %v59 = vsel %vm53, %v58, %v57
    %vm60 = vcmp.lt.s32.totalorder %v38, 0
    %v61 = vsub.s32 0, %v38
    %v62 = vsel %vm60, %v61, %v38
    %v63 = vshrl.u32 %v62, 4
    %v64 = vand.u32 %v62, 15
    %v65 = vsub.s32 0, %v64
    %v66 = vsel %vm60, %v65, %v64
    %vm67 = vcmp.ne.s32.totalorder %v45, 0
    %vm68 = vcmp.ne.s32.totalorder %v52, 0
    %vm69 = vcmp.ne.s32.totalorder %v59, 0
    %vm70 = vcmp.ne.s32.totalorder %v66, 0
    %vm71 = vcmp.lt.s32.totalorder %v45, 0
    %vm72 = vcmp.lt.s32.totalorder %v52, 0
    %vm73 = vcmp.lt.s32.totalorder %v59, 0
    %vm74 = vcmp.lt.s32.totalorder %v66, 0
    %vm75 = vmand %vm71, %vm67
    %vm76 = vmand %vm72, %vm68
    %vm77 = vmand %vm73, %vm69
    %vm78 = vmand %vm74, %vm70
    %v79 = vadd.s32 %v45, 16
    %v80 = vadd.s32 %v52, 16
    %v81 = vadd.s32 %v59, 16
    %v82 = vadd.s32 %v66, 16
    %v83 = vsel %vm75, %v79, %v45
    %v84 = vsel %vm76, %v80, %v52
    %v85 = vsel %vm77, %v81, %v59
    %v86 = vsel %vm78, %v82, %v66
    %vm87 = vcmp.ne.s32.totalorder %v83, 0
    %vm88 = vcmp.ne.s32.totalorder %v84, 0
    %vm89 = vcmp.ne.s32.totalorder %v85, 0
    %vm90 = vcmp.ne.s32.totalorder %v86, 0
    %v91 = vsel %vm87, 1, 0
    %v92 = vsel %vm88, 1, 0
    %v93 = vsel %vm89, 1, 0
    %v94 = vsel %vm90, 1, 0
    %v95 = vcvt.s32.f32 %v91
    %v96 = vcvt.s32.f32 %v92
    %v97 = vcvt.s32.f32 %v93
    %v98 = vcvt.s32.f32 %v94
    %vm99 = vcmp.ne.s32.totalorder %v83, 15
    %vm100 = vcmp.ne.s32.totalorder %v84, 15
    %vm101 = vcmp.ne.s32.totalorder %v85, 15
    %vm102 = vcmp.ne.s32.totalorder %v86, 15
    %v103 = vsel %vm99, 1, 0
    %v104 = vsel %vm100, 1, 0
    %v105 = vsel %vm101, 1, 0
    %v106 = vsel %vm102, 1, 0
    %v107 = vcvt.s32.f32 %v103
    %v108 = vcvt.s32.f32 %v104
    %v109 = vcvt.s32.f32 %v105
    %v110 = vcvt.s32.f32 %v106
    %v111 = vld [vmem:[%s0] sm:$0xff]
    %v112 = vld [vmem:[%s0 + $0x8] sm:$0xff]
    %v113 = vld [vmem:[%s0 + $0x10] sm:$0xff]
    %v114 = vld [vmem:[%s0 + $0x18] sm:$0xff]
    %v115 = vrot.slane %v111, 7
    %v116 = vrot.slane %v112, 7
    %v117 = vrot.slane %v113, 7
    %v118 = vrot.slane %v114, 7
    %vm119 = vcmp.lt.s32.totalorder %v35, 1
    %v120 = vsel %vm119, %v117, %v118
    %v121 = vsel %vm119, %v116, %v117
    %v122 = vsel %vm119, %v115, %v116
    %v123 = vsel %vm119, %v118, %v115
    %v124 = vmul.f32 %v123, %v95
    %v125 = vmul.f32 %v122, %v96
    %v126 = vmul.f32 %v121, %v97
    %v127 = vmul.f32 %v120, %v98
    %v128 = vrot.slane %v111, 1
    %v129 = vrot.slane %v112, 1
    %v130 = vrot.slane %v113, 1
    %v131 = vrot.slane %v114, 1
    %vm132 = vcmp.lt.s32.totalorder %v35, 7
    %v133 = vsel %vm132, %v130, %v131
    %v134 = vsel %vm132, %v129, %v130
    %v135 = vsel %vm132, %v128, %v129
    %v136 = vsel %vm132, %v131, %v128
    %v137 = vmul.f32 %v135, %v107
    %v138 = vmul.f32 %v134, %v108
    %v139 = vmul.f32 %v133, %v109
    %v140 = vmul.f32 %v136, %v110
    %s141 = scalar_lea.vmem %s1, 1
    %v142 = vld [vmem:[%s141] sm:$0x1]
    %144 = vset.pattern.permute.xlu0 0
    %145 = vperm.xlu0 %144, %v111
    %v146 = vpop.permute.xlu0 %145
    %149 = vset.pattern.permute.xlu0 0
    %150 = vperm.xlu0 %149, %v112
    %v151 = vpop.permute.xlu0 %150
    %154 = vset.pattern.permute.xlu0 0
    %155 = vperm.xlu0 %154, %v113
    %v156 = vpop.permute.xlu0 %155
    %159 = vset.pattern.permute.xlu0 0
    %160 = vperm.xlu0 %159, %v114
    %v161 = vpop.permute.xlu0 %160
    %v164 = vlaneseq
    %v165 = vshrl.u32 %v164, 7
    %v166 = vsub.s32 0, %v165
    %v167 = vrot.slane %v142, %v166
    %v169 = vmul.f32 %v146, %v167
    %v170 = vmul.f32 %v151, %v167
    %v171 = vmul.f32 %v156, %v167
    %v172 = vmul.f32 %v161, %v167
    %v173 = vld [vmem:[%s1] sm:$0x1]
    %175 = vset.pattern.permute.xlu0 0
    %176 = vperm.xlu0 %175, %v124
    %v177 = vpop.permute.xlu0 %176
    %180 = vset.pattern.permute.xlu0 0
    %181 = vperm.xlu0 %180, %v125
    %v182 = vpop.permute.xlu0 %181
    %185 = vset.pattern.permute.xlu0 0
    %186 = vperm.xlu0 %185, %v126
    %v187 = vpop.permute.xlu0 %186
    %190 = vset.pattern.permute.xlu0 0
    %191 = vperm.xlu0 %190, %v127
    %v192 = vpop.permute.xlu0 %191
    %v195 = vlaneseq
    %v196 = vshrl.u32 %v195, 7
    %v197 = vsub.s32 0, %v196
    %v198 = vrot.slane %v173, %v197
    %v200 = vmul.f32 %v177, %v198
    %v201 = vmul.f32 %v182, %v198
    %v202 = vmul.f32 %v187, %v198
    %v203 = vmul.f32 %v192, %v198
    %v204 = vadd.f32 %v169, %v200
    %v205 = vadd.f32 %v170, %v201
    %v206 = vadd.f32 %v171, %v202
    %v207 = vadd.f32 %v172, %v203
    %s208 = scalar_lea.vmem %s1, 2
    %v209 = vld [vmem:[%s208] sm:$0x1]
    %211 = vset.pattern.permute.xlu0 0
    %212 = vperm.xlu0 %211, %v137
    %v213 = vpop.permute.xlu0 %212
    %216 = vset.pattern.permute.xlu0 0
    %217 = vperm.xlu0 %216, %v138
    %v218 = vpop.permute.xlu0 %217
    %221 = vset.pattern.permute.xlu0 0
    %222 = vperm.xlu0 %221, %v139
    %v223 = vpop.permute.xlu0 %222
    %226 = vset.pattern.permute.xlu0 0
    %227 = vperm.xlu0 %226, %v140
    %v228 = vpop.permute.xlu0 %227
    %v231 = vlaneseq
    %v232 = vshrl.u32 %v231, 7
    %v233 = vsub.s32 0, %v232
    %v234 = vrot.slane %v209, %v233
    %v236 = vmul.f32 %v213, %v234
    %v237 = vmul.f32 %v218, %v234
    %v238 = vmul.f32 %v223, %v234
    %v239 = vmul.f32 %v228, %v234
    %v240 = vadd.f32 %v204, %v236
    %v241 = vadd.f32 %v205, %v237
    %v242 = vadd.f32 %v206, %v238
    %v243 = vadd.f32 %v207, %v239
    %v244 = vld [vmem:[%s2] sm:$0x1]
    %v246 = vlaneseq
    %v247 = vshrl.u32 %v246, 7
    %v248 = vsub.s32 0, %v247
    %v249 = vrot.slane %v244, %v248
    %v251 = vadd.f32 %v240, %v249
    %v252 = vadd.f32 %v241, %v249
    %v253 = vadd.f32 %v242, %v249
    %v254 = vadd.f32 %v243, %v249
    %v255 = vmax.f32 %v251, 0.0
    %v256 = vmax.f32 %v252, 0.0
    %v257 = vmax.f32 %v253, 0.0
    %v258 = vmax.f32 %v254, 0.0
    %v259 = vrot.slane %v255, 7
    %v260 = vrot.slane %v256, 7
    %v261 = vrot.slane %v257, 7
    %v262 = vrot.slane %v258, 7
    %v263 = vsel %vm119, %v261, %v262
    %v264 = vsel %vm119, %v260, %v261
    %v265 = vsel %vm119, %v259, %v260
    %v266 = vsel %vm119, %v262, %v259
    %v267 = vmul.f32 %v266, %v95
    %v268 = vmul.f32 %v265, %v96
    %v269 = vmul.f32 %v264, %v97
    %v270 = vmul.f32 %v263, %v98
    %v271 = vrot.slane %v255, 1
    %v272 = vrot.slane %v256, 1
    %v273 = vrot.slane %v257, 1
    %v274 = vrot.slane %v258, 1
    %v275 = vsel %vm132, %v273, %v274
    %v276 = vsel %vm132, %v272, %v273
    %v277 = vsel %vm132, %v271, %v272
    %v278 = vsel %vm132, %v274, %v271
    %v279 = vmul.f32 %v277, %v107
    %v280 = vmul.f32 %v276, %v108
    %v281 = vmul.f32 %v275, %v109
    %v282 = vmul.f32 %v278, %v110
    %v283 = vpack.c.bf16 %v256, %v255
    %v284 = vpack.c.bf16 %v258, %v257
    %s285 = scalar_lea.vmem %s3, 16
    %v286 = vld [vmem:[%s285] sm:$0xf]
    %v287 = vld [vmem:[%s285 + $0x4] sm:$0xf]
    %v288 = vld [vmem:[%s285 + $0x8] sm:$0xf]
    %v289 = vld [vmem:[%s285 + $0xc] sm:$0xf]
    %v290 = vpack.c.bf16 %v268, %v267
    %v291 = vpack.c.bf16 %v270, %v269
    %v292 = vld [vmem:[%s3] sm:$0xf]
    %v293 = vld [vmem:[%s3 + $0x4] sm:$0xf]
    %v294 = vld [vmem:[%s3 + $0x8] sm:$0xf]
    %v295 = vld [vmem:[%s3 + $0xc] sm:$0xf]
    %v300 = vunpack.c.l.b16 %v292
    %v301 = vunpack.c.l.b16 %v293
    %v302 = vunpack.c.l.b16 %v294
    %v303 = vunpack.c.l.b16 %v295
    %v304 = vpack.c.b16 %v301, %v300
    %v305 = vpack.c.b16 %v303, %v302
    %vm308 = vcmask 261120
    %v310 = vsel %vm308, %v290, 0
    %v313 = vsel %vm308, %v291, 0
    %315 = vmatprep.subr.bf16.mxu0 0
    %316 = vmatpush1.bf16.msra.mxu0 0
    %317 = vmatprep.subr.bf16.mxu0 0
    %318 = vmatpush1.bf16.msra.mxu0 0
    %319 = vmatprep.subr.bf16.mxu0 0
    %320 = vmatpush1.bf16.msra.mxu0 0
    %321 = vmatprep.subr.bf16.mxu0 0
    %322 = vmatpush1.bf16.msra.mxu0 0
    %323 = vmatprep.subr.bf16.mxu0 0
    %324 = vmatpush1.bf16.msra.mxu0 0
    %325 = vmatprep.subr.bf16.mxu0 0
    %326 = vmatpush1.bf16.msra.mxu0 0
    %327 = vmatprep.subr.bf16.mxu0 0
    %328 = vmatpush1.bf16.msra.mxu0 %v305
    %329 = vmatprep.subr.bf16.mxu0 0
    %330 = vmatpush1.bf16.msra.mxu0 %v304
    %331 = vmatprep.subr.bf16.mxu0 0
    %332 = vmatpush2.bf16.msra.mxu0 0
    %333 = vmatprep.subr.bf16.mxu0 0
    %334 = vmatpush2.bf16.msra.mxu0 0
    %335 = vmatprep.subr.bf16.mxu0 0
    %336 = vmatpush2.bf16.msra.mxu0 0
    %337 = vmatprep.subr.bf16.mxu0 0
    %338 = vmatpush2.bf16.msra.mxu0 0
    %339 = vmatprep.subr.bf16.mxu0 0
    %340 = vmatpush2.bf16.msra.mxu0 0
    %341 = vmatprep.subr.bf16.mxu0 0
    %342 = vmatpush2.bf16.msra.mxu0 0
    %343 = vmatprep.subr.bf16.mxu0 0
    %344 = vmatpush2.bf16.msra.mxu0 0
    %345 = vmatprep.subr.bf16.mxu0 0
    %346 = vmatpush2.bf16.msra.mxu0 0
    %347 = vmatprep.mubr.bf16.mxu0 0
    %348 = vmatmul.mubr.bf16.gmra.mxu0 %v310
    %v349 = vpop.f32.mrf.mxu0
    %v350 = vadd.f32 0.0, %v349
    %v351 = vpop.f32.mrf.mxu0
    %v352 = vpop.f32.mrf.mxu0
    %v353 = vadd.f32 0.0, %v352
    %v354 = vpop.f32.mrf.mxu0
    %355 = vmatprep.mubr.bf16.mxu0 0
    %356 = vmatmul.mubr.bf16.gmra.mxu0 %v313
    %v357 = vpop.f32.mrf.mxu0
    %v358 = vadd.f32 0.0, %v357
    %v359 = vpop.f32.mrf.mxu0
    %v360 = vpop.f32.mrf.mxu0
    %v361 = vadd.f32 0.0, %v360
    %v362 = vpop.f32.mrf.mxu0
    %363 = vdwg.mxu0
    %v368 = vunpack.c.l.b16 %v286
    %v369 = vunpack.c.l.b16 %v287
    %v370 = vunpack.c.l.b16 %v288
    %v371 = vunpack.c.l.b16 %v289
    %v372 = vpack.c.b16 %v369, %v368
    %v373 = vpack.c.b16 %v371, %v370
    %v377 = vsel %vm308, %v283, 0
    %v380 = vsel %vm308, %v284, 0
    %382 = vmatprep.subr.bf16.mxu0 0
    %383 = vmatpush1.bf16.msra.mxu0 0
    %384 = vmatprep.subr.bf16.mxu0 0
    %385 = vmatpush1.bf16.msra.mxu0 0
    %386 = vmatprep.subr.bf16.mxu0 0
    %387 = vmatpush1.bf16.msra.mxu0 0
    %388 = vmatprep.subr.bf16.mxu0 0
    %389 = vmatpush1.bf16.msra.mxu0 0
    %390 = vmatprep.subr.bf16.mxu0 0
    %391 = vmatpush1.bf16.msra.mxu0 0
    %392 = vmatprep.subr.bf16.mxu0 0
    %393 = vmatpush1.bf16.msra.mxu0 0
    %394 = vmatprep.subr.bf16.mxu0 0
    %395 = vmatpush1.bf16.msra.mxu0 %v373
    %396 = vmatprep.subr.bf16.mxu0 0
    %397 = vmatpush1.bf16.msra.mxu0 %v372
    %398 = vmatprep.subr.bf16.mxu0 0
    %399 = vmatpush2.bf16.msra.mxu0 0
    %400 = vmatprep.subr.bf16.mxu0 0
    %401 = vmatpush2.bf16.msra.mxu0 0
    %402 = vmatprep.subr.bf16.mxu0 0
    %403 = vmatpush2.bf16.msra.mxu0 0
    %404 = vmatprep.subr.bf16.mxu0 0
    %405 = vmatpush2.bf16.msra.mxu0 0
    %406 = vmatprep.subr.bf16.mxu0 0
    %407 = vmatpush2.bf16.msra.mxu0 0
    %408 = vmatprep.subr.bf16.mxu0 0
    %409 = vmatpush2.bf16.msra.mxu0 0
    %410 = vmatprep.subr.bf16.mxu0 0
    %411 = vmatpush2.bf16.msra.mxu0 0
    %412 = vmatprep.subr.bf16.mxu0 0
    %413 = vmatpush2.bf16.msra.mxu0 0
    %414 = vmatprep.mubr.bf16.mxu0 0
    %415 = vmatmul.mubr.bf16.gmra.mxu0 %v377
    %v416 = vpop.f32.mrf.mxu0
    %v417 = vadd.f32 %v350, %v416
    %v418 = vpop.f32.mrf.mxu0
    %v419 = vpop.f32.mrf.mxu0
    %v420 = vadd.f32 %v353, %v419
    %v421 = vpop.f32.mrf.mxu0
    %422 = vmatprep.mubr.bf16.mxu0 0
    %423 = vmatmul.mubr.bf16.gmra.mxu0 %v380
    %v424 = vpop.f32.mrf.mxu0
    %v425 = vadd.f32 %v358, %v424
    %v426 = vpop.f32.mrf.mxu0
    %v427 = vpop.f32.mrf.mxu0
    %v428 = vadd.f32 %v361, %v427
    %v429 = vpop.f32.mrf.mxu0
    %430 = vdwg.mxu0
    %v431 = vpack.c.bf16 %v280, %v279
    %v432 = vpack.c.bf16 %v282, %v281
    %s433 = scalar_lea.vmem %s3, 32
    %v434 = vld [vmem:[%s433] sm:$0xf]
    %v435 = vld [vmem:[%s433 + $0x4] sm:$0xf]
    %v436 = vld [vmem:[%s433 + $0x8] sm:$0xf]
    %v437 = vld [vmem:[%s433 + $0xc] sm:$0xf]
    %v442 = vunpack.c.l.b16 %v434
    %v443 = vunpack.c.l.b16 %v435
    %v444 = vunpack.c.l.b16 %v436
    %v445 = vunpack.c.l.b16 %v437
    %v446 = vpack.c.b16 %v443, %v442
    %v447 = vpack.c.b16 %v445, %v444
    %v451 = vsel %vm308, %v431, 0
    %v454 = vsel %vm308, %v432, 0
    %456 = vmatprep.subr.bf16.mxu0 0
    %457 = vmatpush1.bf16.msra.mxu0 0
    %458 = vmatprep.subr.bf16.mxu0 0
    %459 = vmatpush1.bf16.msra.mxu0 0
    %460 = vmatprep.subr.bf16.mxu0 0
    %461 = vmatpush1.bf16.msra.mxu0 0
    %462 = vmatprep.subr.bf16.mxu0 0
    %463 = vmatpush1.bf16.msra.mxu0 0
    %464 = vmatprep.subr.bf16.mxu0 0
    %465 = vmatpush1.bf16.msra.mxu0 0
    %466 = vmatprep.subr.bf16.mxu0 0
    %467 = vmatpush1.bf16.msra.mxu0 0
    %468 = vmatprep.subr.bf16.mxu0 0
    %469 = vmatpush1.bf16.msra.mxu0 %v447
    %470 = vmatprep.subr.bf16.mxu0 0
    %471 = vmatpush1.bf16.msra.mxu0 %v446
    %472 = vmatprep.subr.bf16.mxu0 0
    %473 = vmatpush2.bf16.msra.mxu0 0
    %474 = vmatprep.subr.bf16.mxu0 0
    %475 = vmatpush2.bf16.msra.mxu0 0
    %476 = vmatprep.subr.bf16.mxu0 0
    %477 = vmatpush2.bf16.msra.mxu0 0
    %478 = vmatprep.subr.bf16.mxu0 0
    %479 = vmatpush2.bf16.msra.mxu0 0
    %480 = vmatprep.subr.bf16.mxu0 0
    %481 = vmatpush2.bf16.msra.mxu0 0
    %482 = vmatprep.subr.bf16.mxu0 0
    %483 = vmatpush2.bf16.msra.mxu0 0
    %484 = vmatprep.subr.bf16.mxu0 0
    %485 = vmatpush2.bf16.msra.mxu0 0
    %486 = vmatprep.subr.bf16.mxu0 0
    %487 = vmatpush2.bf16.msra.mxu0 0
    %488 = vmatprep.mubr.bf16.mxu0 0
    %489 = vmatmul.mubr.bf16.gmra.mxu0 %v451
    %v490 = vpop.f32.mrf.mxu0
    %v491 = vadd.f32 0.0, %v490
    %v492 = vpop.f32.mrf.mxu0
    %v493 = vpop.f32.mrf.mxu0
    %v494 = vadd.f32 0.0, %v493
    %v495 = vpop.f32.mrf.mxu0
    %496 = vmatprep.mubr.bf16.mxu0 0
    %497 = vmatmul.mubr.bf16.gmra.mxu0 %v454
    %v498 = vpop.f32.mrf.mxu0
    %v499 = vadd.f32 0.0, %v498
    %v500 = vpop.f32.mrf.mxu0
    %v501 = vpop.f32.mrf.mxu0
    %v502 = vadd.f32 0.0, %v501
    %v503 = vpop.f32.mrf.mxu0
    %504 = vdwg.mxu0
    %v505 = vadd.f32 %v417, %v491
    %v506 = vadd.f32 %v420, %v494
    %v507 = vadd.f32 %v425, %v499
    %v508 = vadd.f32 %v428, %v502
    %v509 = vld [vmem:[%s4] sm:$0x1]
    %v511 = vlaneseq
    %v512 = vshrl.u32 %v511, 7
    %v513 = vsub.s32 0, %v512
    %v514 = vrot.slane %v509, %v513
    %v516 = vadd.f32 %v505, %v514
    %v517 = vadd.f32 %v506, %v514
    %v518 = vadd.f32 %v507, %v514
    %v519 = vadd.f32 %v508, %v514
    %v520 = vmax.f32 %v516, 0.0
    %v521 = vmax.f32 %v517, 0.0
    %v522 = vmax.f32 %v518, 0.0
    %v523 = vmax.f32 %v519, 0.0
    %v524 = vrot.slane %v520, 7
    %v525 = vrot.slane %v521, 7
    %v526 = vrot.slane %v522, 7
    %v527 = vrot.slane %v523, 7
    %v528 = vsel %vm119, %v526, %v527
    %v529 = vsel %vm119, %v525, %v526
    %v530 = vsel %vm119, %v524, %v525
    %v531 = vsel %vm119, %v527, %v524
    %v532 = vmul.f32 %v531, %v95
    %v533 = vmul.f32 %v530, %v96
    %v534 = vmul.f32 %v529, %v97
    %v535 = vmul.f32 %v528, %v98
    %v536 = vrot.slane %v520, 1
    %v537 = vrot.slane %v521, 1
    %v538 = vrot.slane %v522, 1
    %v539 = vrot.slane %v523, 1
    %v540 = vsel %vm132, %v538, %v539
    %v541 = vsel %vm132, %v537, %v538
    %v542 = vsel %vm132, %v536, %v537
    %v543 = vsel %vm132, %v539, %v536
    %v544 = vmul.f32 %v542, %v107
    %v545 = vmul.f32 %v541, %v108
    %v546 = vmul.f32 %v540, %v109
    %v547 = vmul.f32 %v543, %v110
    %v548 = vpack.c.bf16 %v521, %v520
    %v549 = vpack.c.bf16 %v523, %v522
    %s550 = scalar_lea.vmem %s5, 32
    %v551 = vld [vmem:[%s550] sm:$0xf]
    %v552 = vld [vmem:[%s550 + $0x4] sm:$0xf]
    %v553 = vld [vmem:[%s550 + $0x8] sm:$0xf]
    %v554 = vld [vmem:[%s550 + $0xc] sm:$0xf]
    %v555 = vld [vmem:[%s550 + $0x10] sm:$0xf]
    %v556 = vld [vmem:[%s550 + $0x14] sm:$0xf]
    %v557 = vld [vmem:[%s550 + $0x18] sm:$0xf]
    %v558 = vld [vmem:[%s550 + $0x1c] sm:$0xf]
    %v559 = vpack.c.bf16 %v533, %v532
    %v560 = vpack.c.bf16 %v535, %v534
    %v561 = vld [vmem:[%s5] sm:$0xf]
    %v562 = vld [vmem:[%s5 + $0x4] sm:$0xf]
    %v563 = vld [vmem:[%s5 + $0x8] sm:$0xf]
    %v564 = vld [vmem:[%s5 + $0xc] sm:$0xf]
    %v565 = vld [vmem:[%s5 + $0x10] sm:$0xf]
    %v566 = vld [vmem:[%s5 + $0x14] sm:$0xf]
    %v567 = vld [vmem:[%s5 + $0x18] sm:$0xf]
    %v568 = vld [vmem:[%s5 + $0x1c] sm:$0xf]
    %v577 = vunpack.c.l.b16 %v561
    %v578 = vunpack.c.l.b16 %v562
    %v579 = vunpack.c.l.b16 %v563
    %v580 = vunpack.c.l.b16 %v564
    %v581 = vunpack.c.l.b16 %v565
    %v582 = vunpack.c.l.b16 %v566
    %v583 = vunpack.c.l.b16 %v567
    %v584 = vunpack.c.l.b16 %v568
    %v585 = vpack.c.b16 %v578, %v577
    %v586 = vpack.c.b16 %v580, %v579
    %v587 = vpack.c.b16 %v582, %v581
    %v588 = vpack.c.b16 %v584, %v583
    %vm593 = vcmask 523264
    %v595 = vsel %vm593, %v559, 0
    %v598 = vsel %vm593, %v560, 0
    %600 = vmatprep.subr.bf16.mxu0 0
    %601 = vmatpush1.bf16.msra.mxu0 0
    %602 = vmatprep.subr.bf16.mxu0 0
    %603 = vmatpush1.bf16.msra.mxu0 0
    %604 = vmatprep.subr.bf16.mxu0 0
    %605 = vmatpush1.bf16.msra.mxu0 0
    %606 = vmatprep.subr.bf16.mxu0 0
    %607 = vmatpush1.bf16.msra.mxu0 0
    %608 = vmatprep.subr.bf16.mxu0 0
    %609 = vmatpush1.bf16.msra.mxu0 %v588
    %610 = vmatprep.subr.bf16.mxu0 0
    %611 = vmatpush1.bf16.msra.mxu0 %v587
    %612 = vmatprep.subr.bf16.mxu0 0
    %613 = vmatpush1.bf16.msra.mxu0 %v586
    %614 = vmatprep.subr.bf16.mxu0 0
    %615 = vmatpush1.bf16.msra.mxu0 %v585
    %616 = vmatprep.subr.bf16.mxu0 0
    %617 = vmatpush2.bf16.msra.mxu0 0
    %618 = vmatprep.subr.bf16.mxu0 0
    %619 = vmatpush2.bf16.msra.mxu0 0
    %620 = vmatprep.subr.bf16.mxu0 0
    %621 = vmatpush2.bf16.msra.mxu0 0
    %622 = vmatprep.subr.bf16.mxu0 0
    %623 = vmatpush2.bf16.msra.mxu0 0
    %624 = vmatprep.subr.bf16.mxu0 0
    %625 = vmatpush2.bf16.msra.mxu0 0
    %626 = vmatprep.subr.bf16.mxu0 0
    %627 = vmatpush2.bf16.msra.mxu0 0
    %628 = vmatprep.subr.bf16.mxu0 0
    %629 = vmatpush2.bf16.msra.mxu0 0
    %630 = vmatprep.subr.bf16.mxu0 0
    %631 = vmatpush2.bf16.msra.mxu0 0
    %632 = vmatprep.mubr.bf16.mxu0 0
    %633 = vmatmul.mubr.bf16.gmra.mxu0 %v595
    %v634 = vpop.f32.mrf.mxu0
    %v635 = vadd.f32 0.0, %v634
    %v636 = vpop.f32.mrf.mxu0
    %v637 = vpop.f32.mrf.mxu0
    %v638 = vadd.f32 0.0, %v637
    %v639 = vpop.f32.mrf.mxu0
    %640 = vmatprep.mubr.bf16.mxu0 0
    %641 = vmatmul.mubr.bf16.gmra.mxu0 %v598
    %v642 = vpop.f32.mrf.mxu0
    %v643 = vadd.f32 0.0, %v642
    %v644 = vpop.f32.mrf.mxu0
    %v645 = vpop.f32.mrf.mxu0
    %v646 = vadd.f32 0.0, %v645
    %v647 = vpop.f32.mrf.mxu0
    %648 = vdwg.mxu0
    %v657 = vunpack.c.l.b16 %v551
    %v658 = vunpack.c.l.b16 %v552
    %v659 = vunpack.c.l.b16 %v553
    %v660 = vunpack.c.l.b16 %v554
    %v661 = vunpack.c.l.b16 %v555
    %v662 = vunpack.c.l.b16 %v556
    %v663 = vunpack.c.l.b16 %v557
    %v664 = vunpack.c.l.b16 %v558
    %v665 = vpack.c.b16 %v658, %v657
    %v666 = vpack.c.b16 %v660, %v659
    %v667 = vpack.c.b16 %v662, %v661
    %v668 = vpack.c.b16 %v664, %v663
    %v674 = vsel %vm593, %v548, 0
    %v677 = vsel %vm593, %v549, 0
    %679 = vmatprep.subr.bf16.mxu0 0
    %680 = vmatpush1.bf16.msra.mxu0 0
    %681 = vmatprep.subr.bf16.mxu0 0
    %682 = vmatpush1.bf16.msra.mxu0 0
    %683 = vmatprep.subr.bf16.mxu0 0
    %684 = vmatpush1.bf16.msra.mxu0 0
    %685 = vmatprep.subr.bf16.mxu0 0
    %686 = vmatpush1.bf16.msra.mxu0 0
    %687 = vmatprep.subr.bf16.mxu0 0
    %688 = vmatpush1.bf16.msra.mxu0 %v668
    %689 = vmatprep.subr.bf16.mxu0 0
    %690 = vmatpush1.bf16.msra.mxu0 %v667
    %691 = vmatprep.subr.bf16.mxu0 0
    %692 = vmatpush1.bf16.msra.mxu0 %v666
    %693 = vmatprep.subr.bf16.mxu0 0
    %694 = vmatpush1.bf16.msra.mxu0 %v665
    %695 = vmatprep.subr.bf16.mxu0 0
    %696 = vmatpush2.bf16.msra.mxu0 0
    %697 = vmatprep.subr.bf16.mxu0 0
    %698 = vmatpush2.bf16.msra.mxu0 0
    %699 = vmatprep.subr.bf16.mxu0 0
    %700 = vmatpush2.bf16.msra.mxu0 0
    %701 = vmatprep.subr.bf16.mxu0 0
    %702 = vmatpush2.bf16.msra.mxu0 0
    %703 = vmatprep.subr.bf16.mxu0 0
    %704 = vmatpush2.bf16.msra.mxu0 0
    %705 = vmatprep.subr.bf16.mxu0 0
    %706 = vmatpush2.bf16.msra.mxu0 0
    %707 = vmatprep.subr.bf16.mxu0 0
    %708 = vmatpush2.bf16.msra.mxu0 0
    %709 = vmatprep.subr.bf16.mxu0 0
    %710 = vmatpush2.bf16.msra.mxu0 0
    %711 = vmatprep.mubr.bf16.mxu0 0
    %712 = vmatmul.mubr.bf16.gmra.mxu0 %v674
    %v713 = vpop.f32.mrf.mxu0
    %v714 = vadd.f32 %v635, %v713
    %v715 = vpop.f32.mrf.mxu0
    %v716 = vpop.f32.mrf.mxu0
    %v717 = vadd.f32 %v638, %v716
    %v718 = vpop.f32.mrf.mxu0
    %719 = vmatprep.mubr.bf16.mxu0 0
    %720 = vmatmul.mubr.bf16.gmra.mxu0 %v677
    %v721 = vpop.f32.mrf.mxu0
    %v722 = vadd.f32 %v643, %v721
    %v723 = vpop.f32.mrf.mxu0
    %v724 = vpop.f32.mrf.mxu0
    %v725 = vadd.f32 %v646, %v724
    %v726 = vpop.f32.mrf.mxu0
    %727 = vdwg.mxu0
    %v728 = vpack.c.bf16 %v545, %v544
    %v729 = vpack.c.bf16 %v547, %v546
    %s730 = scalar_lea.vmem %s5, 64
    %v731 = vld [vmem:[%s730] sm:$0xf]
    %v732 = vld [vmem:[%s730 + $0x4] sm:$0xf]
    %v733 = vld [vmem:[%s730 + $0x8] sm:$0xf]
    %v734 = vld [vmem:[%s730 + $0xc] sm:$0xf]
    %v735 = vld [vmem:[%s730 + $0x10] sm:$0xf]
    %v736 = vld [vmem:[%s730 + $0x14] sm:$0xf]
    %v737 = vld [vmem:[%s730 + $0x18] sm:$0xf]
    %v738 = vld [vmem:[%s730 + $0x1c] sm:$0xf]
    %v747 = vunpack.c.l.b16 %v731
    %v748 = vunpack.c.l.b16 %v732
    %v749 = vunpack.c.l.b16 %v733
    %v750 = vunpack.c.l.b16 %v734
    %v751 = vunpack.c.l.b16 %v735
    %v752 = vunpack.c.l.b16 %v736
    %v753 = vunpack.c.l.b16 %v737
    %v754 = vunpack.c.l.b16 %v738
    %v755 = vpack.c.b16 %v748, %v747
    %v756 = vpack.c.b16 %v750, %v749
    %v757 = vpack.c.b16 %v752, %v751
    %v758 = vpack.c.b16 %v754, %v753
    %v764 = vsel %vm593, %v728, 0
    %v767 = vsel %vm593, %v729, 0
    %769 = vmatprep.subr.bf16.mxu0 0
    %770 = vmatpush1.bf16.msra.mxu0 0
    %771 = vmatprep.subr.bf16.mxu0 0
    %772 = vmatpush1.bf16.msra.mxu0 0
    %773 = vmatprep.subr.bf16.mxu0 0
    %774 = vmatpush1.bf16.msra.mxu0 0
    %775 = vmatprep.subr.bf16.mxu0 0
    %776 = vmatpush1.bf16.msra.mxu0 0
    %777 = vmatprep.subr.bf16.mxu0 0
    %778 = vmatpush1.bf16.msra.mxu0 %v758
    %779 = vmatprep.subr.bf16.mxu0 0
    %780 = vmatpush1.bf16.msra.mxu0 %v757
    %781 = vmatprep.subr.bf16.mxu0 0
    %782 = vmatpush1.bf16.msra.mxu0 %v756
    %783 = vmatprep.subr.bf16.mxu0 0
    %784 = vmatpush1.bf16.msra.mxu0 %v755
    %785 = vmatprep.subr.bf16.mxu0 0
    %786 = vmatpush2.bf16.msra.mxu0 0
    %787 = vmatprep.subr.bf16.mxu0 0
    %788 = vmatpush2.bf16.msra.mxu0 0
    %789 = vmatprep.subr.bf16.mxu0 0
    %790 = vmatpush2.bf16.msra.mxu0 0
    %791 = vmatprep.subr.bf16.mxu0 0
    %792 = vmatpush2.bf16.msra.mxu0 0
    %793 = vmatprep.subr.bf16.mxu0 0
    %794 = vmatpush2.bf16.msra.mxu0 0
    %795 = vmatprep.subr.bf16.mxu0 0
    %796 = vmatpush2.bf16.msra.mxu0 0
    %797 = vmatprep.subr.bf16.mxu0 0
    %798 = vmatpush2.bf16.msra.mxu0 0
    %799 = vmatprep.subr.bf16.mxu0 0
    %800 = vmatpush2.bf16.msra.mxu0 0
    %801 = vmatprep.mubr.bf16.mxu0 0
    %802 = vmatmul.mubr.bf16.gmra.mxu0 %v764
    %v803 = vpop.f32.mrf.mxu0
    %v804 = vadd.f32 0.0, %v803
    %v805 = vpop.f32.mrf.mxu0
    %v806 = vpop.f32.mrf.mxu0
    %v807 = vadd.f32 0.0, %v806
    %v808 = vpop.f32.mrf.mxu0
    %809 = vmatprep.mubr.bf16.mxu0 0
    %810 = vmatmul.mubr.bf16.gmra.mxu0 %v767
    %v811 = vpop.f32.mrf.mxu0
    %v812 = vadd.f32 0.0, %v811
    %v813 = vpop.f32.mrf.mxu0
    %v814 = vpop.f32.mrf.mxu0
    %v815 = vadd.f32 0.0, %v814
    %v816 = vpop.f32.mrf.mxu0
    %817 = vdwg.mxu0
    %v818 = vadd.f32 %v714, %v804
    %v819 = vadd.f32 %v717, %v807
    %v820 = vadd.f32 %v722, %v812
    %v821 = vadd.f32 %v725, %v815
    %v822 = vld [vmem:[%s6] sm:$0x1]
    %v824 = vlaneseq
    %v825 = vshrl.u32 %v824, 7
    %v826 = vsub.s32 0, %v825
    %v827 = vrot.slane %v822, %v826
    %v829 = vadd.f32 %v818, %v827
    %v830 = vadd.f32 %v819, %v827
    %v831 = vadd.f32 %v820, %v827
    %v832 = vadd.f32 %v821, %v827
    %v833 = vmax.f32 %v829, 0.0
    %v834 = vmax.f32 %v830, 0.0
    %v835 = vmax.f32 %v831, 0.0
    %v836 = vmax.f32 %v832, 0.0
    %v837 = vadd.f32 %v833, %v834
    %v838 = vrot.slane %v837, 4
    %v839 = vadd.f32 %v837, %v838
    %v840 = vrot.slane %v839, 2
    %v841 = vadd.f32 %v839, %v840
    %v842 = vrot.slane %v841, 1
    %v843 = vadd.f32 %v841, %v842
    %v844 = vadd.f32 %v835, %v836
    %v845 = vrot.slane %v844, 4
    %v846 = vadd.f32 %v844, %v845
    %v847 = vrot.slane %v846, 2
    %v848 = vadd.f32 %v846, %v847
    %v849 = vrot.slane %v848, 1
    %v850 = vadd.f32 %v848, %v849
    %v851 = vpack.c.bf16 %v843, %v843
    %v852 = vpack.c.bf16 %v850, %v850
    %v853 = vld [vmem:[%s7] sm:$0xf]
    %v854 = vld [vmem:[%s7 + $0x4] sm:$0xf]
    %v855 = vld [vmem:[%s7 + $0x8] sm:$0xf]
    %v856 = vld [vmem:[%s7 + $0xc] sm:$0xf]
    %v857 = vld [vmem:[%s7 + $0x10] sm:$0xf]
    %v858 = vld [vmem:[%s7 + $0x14] sm:$0xf]
    %v859 = vld [vmem:[%s7 + $0x18] sm:$0xf]
    %v860 = vld [vmem:[%s7 + $0x1c] sm:$0xf]
    %v861 = vld [vmem:[%s7 + $0x20] sm:$0xf]
    %v862 = vld [vmem:[%s7 + $0x24] sm:$0xf]
    %v863 = vld [vmem:[%s7 + $0x28] sm:$0xf]
    %v864 = vld [vmem:[%s7 + $0x2c] sm:$0xf]
    %v865 = vld [vmem:[%s7 + $0x30] sm:$0xf]
    %v866 = vld [vmem:[%s7 + $0x34] sm:$0xf]
    %v867 = vld [vmem:[%s7 + $0x38] sm:$0xf]
    %v868 = vld [vmem:[%s7 + $0x3c] sm:$0xf]
    %v869 = vld [vmem:[%s8] sm:$0x1]
    %v871 = vlaneseq
    %v872 = vshrl.u32 %v871, 7
    %v873 = vsub.s32 0, %v872
    %v874 = vrot.slane %v869, %v873
    %v878 = vunpack.c.l.b16 %v851
    %v879 = vunpack.c.l.b16 %v852
    %vm880 = vcmask 1041409
    %v881 = vsel %vm880, %v879, %v878
    %v882 = vpack.c.b16 %v881, %v881
    %v900 = vunpack.c.l.b16 %v853
    %v901 = vunpack.c.l.b16 %v854
    %v902 = vunpack.c.l.b16 %v855
    %v903 = vunpack.c.l.b16 %v856
    %v904 = vunpack.c.l.b16 %v857
    %v905 = vunpack.c.l.b16 %v858
    %v906 = vunpack.c.l.b16 %v859
    %v907 = vunpack.c.l.b16 %v860
    %v908 = vunpack.c.l.b16 %v861
    %v909 = vunpack.c.l.b16 %v862
    %v910 = vunpack.c.l.b16 %v863
    %v911 = vunpack.c.l.b16 %v864
    %v912 = vunpack.c.l.b16 %v865
    %v913 = vunpack.c.l.b16 %v866
    %v914 = vunpack.c.l.b16 %v867
    %v915 = vunpack.c.l.b16 %v868
    %v916 = vpack.c.b16 %v901, %v900
    %v917 = vpack.c.b16 %v903, %v902
    %v918 = vpack.c.b16 %v905, %v904
    %v919 = vpack.c.b16 %v907, %v906
    %v920 = vpack.c.b16 %v909, %v908
    %v921 = vpack.c.b16 %v911, %v910
    %v922 = vpack.c.b16 %v913, %v912
    %v923 = vpack.c.b16 %v915, %v914
    %932 = vmatprep.subr.bf16.mxu0 0
    %933 = vmatpush1.bf16.msra.mxu0 %v923
    %934 = vmatprep.subr.bf16.mxu0 0
    %935 = vmatpush1.bf16.msra.mxu0 %v922
    %936 = vmatprep.subr.bf16.mxu0 0
    %937 = vmatpush1.bf16.msra.mxu0 %v921
    %938 = vmatprep.subr.bf16.mxu0 0
    %939 = vmatpush1.bf16.msra.mxu0 %v920
    %940 = vmatprep.subr.bf16.mxu0 0
    %941 = vmatpush1.bf16.msra.mxu0 %v919
    %942 = vmatprep.subr.bf16.mxu0 0
    %943 = vmatpush1.bf16.msra.mxu0 %v918
    %944 = vmatprep.subr.bf16.mxu0 0
    %945 = vmatpush1.bf16.msra.mxu0 %v917
    %946 = vmatprep.subr.bf16.mxu0 0
    %947 = vmatpush1.bf16.msra.mxu0 %v916
    %948 = vmatprep.subr.bf16.mxu0 0
    %949 = vmatpush2.bf16.msra.mxu0 0
    %950 = vmatprep.subr.bf16.mxu0 0
    %951 = vmatpush2.bf16.msra.mxu0 0
    %952 = vmatprep.subr.bf16.mxu0 0
    %953 = vmatpush2.bf16.msra.mxu0 0
    %954 = vmatprep.subr.bf16.mxu0 0
    %955 = vmatpush2.bf16.msra.mxu0 0
    %956 = vmatprep.subr.bf16.mxu0 0
    %957 = vmatpush2.bf16.msra.mxu0 0
    %958 = vmatprep.subr.bf16.mxu0 0
    %959 = vmatpush2.bf16.msra.mxu0 0
    %960 = vmatprep.subr.bf16.mxu0 0
    %961 = vmatpush2.bf16.msra.mxu0 0
    %962 = vmatprep.subr.bf16.mxu0 0
    %963 = vmatpush2.bf16.msra.mxu0 0
    %964 = vmatprep.mubr.bf16.mxu0 0
    %965 = vmatmul.mubr.bf16.gmra.mxu0 %v882
    %v966 = vpop.f32.mrf.mxu0
    %v967 = vadd.f32 %v874, %v966
    %v968 = vpop.f32.mrf.mxu0
    %v969 = vpop.f32.mrf.mxu0
    %v970 = vpop.f32.mrf.mxu0
    %971 = vdwg.mxu0
    %972 = vst [vmem:[#allocation2] sm:$0x3] %v967
    // Predicated region
    $region38: #{cnn1d3l_forward.1} parent=1 // pred_check
      _
    $region39: #{cnn1d3l_forward.1} parent=1 // pred_check_branch
      %974 = sbr.rel (0) target = $region41
    $region40: #{cnn1d3l_forward.1} parent=1 // pred_region
      %s976 = ssub.s32 32, 32
      %977 = vsyncadd [#allocation3], %s976
      %s979 = sshll.u32 [#allocation2], 4
      %s980 = int_to_ptr.vmem [resolvable:$true] %s979
      %982 = dma.vmem_to_hbm [thread:$0]  %s980, 32, %s9, [#allocation3]
    $region41: #{cnn1d3l_forward.1} parent=1 // pred_fallthru
      _
    // Predicated region
    $region42: #{cnn1d3l_forward.1} parent=1 // pred_check
      _
    $region43: #{cnn1d3l_forward.1} parent=1 // pred_check_branch
      %984 = sbr.rel (0) target = $region45
    $region44: #{cnn1d3l_forward.1} parent=1 // pred_region
      %985 = dma.done [#allocation3], 32
    $region45: #{cnn1d3l_forward.1} parent=1 // pred_fallthru
      _
    %986 = vsyncpa [#allocation3], 1

</llo_original>
